<compile_context>
chip_gen: v7x
topology: tpu7x:2x2x1
jax: 0.10.0
libtpu: 0.0.40
codegen_flags: <defaults>
</compile_context>

<pallas_src>
import functools

import jax
import jax.numpy as jnp
from jax.experimental import pallas as pl
from jax.experimental.pallas import tpu as pltpu


# ----------------------------- tiling / budgets ------------------------------


@functools.lru_cache(maxsize=None)
def _budget():
    """(per-block byte cap, scoped-VMEM limit), generation aware.

    The normalize pass double-buffers one input and one output block
    (4 x block bytes live), so block_cap = vmem_limit // 12 leaves ~3x headroom
    for compiler scratch.  v7x (64 MiB VMEM/TC) -> 4 MiB blocks / 48 MiB limit;
    v5e/v6e (128 MiB) -> 8 MiB blocks / 96 MiB limit.
    """
    try:
        vmem_cap = int(pltpu.get_tpu_info().vmem_capacity_bytes)
    except Exception:  # info unavailable: assume the smallest (v7x-class) VMEM
        vmem_cap = 64 * 1024 * 1024
    vmem_limit = min(vmem_cap * 3 // 4, 96 * 1024 * 1024)
    block_cap = min(vmem_limit // 12, 8 * 1024 * 1024)
    return block_cap, vmem_limit


def _pick_tc(C, cap=512):
    """Channel-block size: full C if small, else largest divisor of C that is a
    multiple of 8 (sublane quantum) and <= cap (falls back to C)."""
    if C <= cap:
        return C
    t = (cap // 8) * 8
    while t >= 8:
        if C % t == 0:
            return t
        t -= 8
    return C


def _pick_lane_tile(extent, row_bytes, block_cap):
    """Largest lane-axis tile (multiple of 128, or the full extent) in budget."""
    if extent * row_bytes <= block_cap:
        return extent
    return max(128, (block_cap // row_bytes) // 128 * 128)


def _pick_row_tile(extent, row_bytes, block_cap):
    """Largest sublane-axis tile (multiple of 8, or the full extent) in budget."""
    if extent * row_bytes <= block_cap:
        return extent
    return max(8, (block_cap // row_bytes) // 8 * 8)


# --------------------- 4-D (NCHW) path: x viewed as (N, C, HW) ---------------


def _bn_sums_nchw_kernel(x_ref, sum_ref, sumsq_ref, *, hw, needs_mask):
    """Accumulate per-channel sum / sum-of-squares for one (shard, c-block).

    The accumulator blocks keep a constant block index across the trailing two
    (reduction) grid axes, so they stay resident in VMEM and are written back
    to HBM once per (shard, channel-block).
    """
    n = pl.program_id(2)
    w = pl.program_id(3)

    @pl.when(jnp.logical_and(n == 0, w == 0))
    def _():
        sum_ref[...] = jnp.zeros_like(sum_ref)
        sumsq_ref[...] = jnp.zeros_like(sumsq_ref)

    x = x_ref[0].astype(jnp.float32)                       # (tc, tw)
    if needs_mask:  # partial edge tile: zero out-of-bounds lanes before summing
        lane = jax.lax.broadcasted_iota(jnp.int32, x.shape, 1)
        x = jnp.where(w * x.shape[1] + lane < hw, x, 0.0)
    # Per-step cross-lane reduce; XLU/VALU have ample slack on this HBM-bound
    # stream, so a lane-dense (C, 128) partial accumulator is not needed.
    sum_ref[0] += jnp.sum(x, axis=1, keepdims=True)
    sumsq_ref[0] += jnp.sum(x * x, axis=1, keepdims=True)


def _bn_norm_nchw_kernel(x_ref, scale_ref, shift_ref, y_ref):
    """y = x * scale + shift — one FMA per element, lane-dense stores."""
    x = x_ref[0].astype(jnp.float32)                       # (tc, tw)
    y_ref[0] = (x * scale_ref[...] + shift_ref[...]).astype(y_ref.dtype)


def _bn_sums_nchw(x3d, *, block_cap=None):
    """Per-channel sum / sum-of-squares of a (N, C, HW) array -> two (C, 1)."""
    N, C, HW = x3d.shape
    default_cap, vmem_limit = _budget()
    block_cap = default_cap if block_cap is None else block_cap
    itemsize = jnp.dtype(x3d.dtype).itemsize
    tc = _pick_tc(C)
    tw = _pick_lane_tile(HW, tc * itemsize, block_cap)
    n_c = C // tc
    n_w = pl.cdiv(HW, tw)
    needs_mask = (HW % tw) != 0
    # Two shards on the leading "parallel" axis keep both v7x TensorCores busy;
    # on single-TC chips the extra shard only costs one more tiny (C, 1) block.
    n_shards = 2 if (N >= 2 and N % 2 == 0) else 1
    n_per = N // n_shards

    kernel = functools.partial(_bn_sums_nchw_kernel, hw=HW, needs_mask=needs_mask)
    acc_spec = pl.BlockSpec((1, tc, 1), lambda s, c, n, w: (s, c, 0))
    acc_shape = jax.ShapeDtypeStruct((n_shards, C, 1), jnp.float32)
    # TODO(synk): sweep pipeline_mode=pl.Buffered(3) on the x stream once VMEM
    # headroom on the target generation is confirmed (expected low-single-%).
    sums, sumsqs = pl.pallas_call(
        kernel,
        grid=(n_shards, n_c, n_per, n_w),
        in_specs=[pl.BlockSpec((1, tc, tw),
                               lambda s, c, n, w: (s * n_per + n, c, w))],
        out_specs=(acc_spec, acc_spec),
        out_shape=(acc_shape, acc_shape),
        compiler_params=pltpu.CompilerParams(
            dimension_semantics=("parallel", "parallel", "arbitrary", "arbitrary"),
            vmem_limit_bytes=vmem_limit),
    )(x3d)
    return jnp.sum(sums, axis=0), jnp.sum(sumsqs, axis=0)   # (C, 1) each


def _bn_norm_nchw(x3d, scale_c1, shift_c1, out_dtype, *, block_cap=None):
    N, C, HW = x3d.shape
    default_cap, vmem_limit = _budget()
    block_cap = default_cap if block_cap is None else block_cap
    itemsize = max(jnp.dtype(x3d.dtype).itemsize, jnp.dtype(out_dtype).itemsize)
    tc = _pick_tc(C)
    tw = _pick_lane_tile(HW, tc * itemsize, block_cap)
    n_c = C // tc
    n_w = pl.cdiv(HW, tw)
    data_spec = pl.BlockSpec((1, tc, tw), lambda n, c, w: (n, c, w))
    stat_spec = pl.BlockSpec((tc, 1), lambda n, c, w: (c, 0))
    return pl.pallas_call(
        _bn_norm_nchw_kernel,
        grid=(N, n_c, n_w),
        in_specs=[data_spec, stat_spec, stat_spec],
        out_specs=data_spec,
        out_shape=jax.ShapeDtypeStruct((N, C, HW), out_dtype),
        compiler_params=pltpu.CompilerParams(
            dimension_semantics=("parallel", "parallel", "parallel"),
            vmem_limit_bytes=vmem_limit),
    )(x3d, scale_c1, shift_c1)


# ------------------- 2-D (fully-connected) path: (M, C) ----------------------


def _bn_sums_rows_kernel(x_ref, sum_ref, sumsq_ref, *, m_total, needs_mask):
    i = pl.program_id(0)

    @pl.when(i == 0)
    def _():
        sum_ref[...] = jnp.zeros_like(sum_ref)
        sumsq_ref[...] = jnp.zeros_like(sumsq_ref)

    x = x_ref[...].astype(jnp.float32)                     # (tm, Ceff)
    if needs_mask:  # partial edge tile: zero out-of-bounds rows before summing
        row = jax.lax.broadcasted_iota(jnp.int32, x.shape, 0)
        x = jnp.where(i * x.shape[0] + row < m_total, x, 0.0)
    sum_ref[...] += jnp.sum(x, axis=0, keepdims=True)
    sumsq_ref[...] += jnp.sum(x * x, axis=0, keepdims=True)


def _bn_norm_rows_kernel(x_ref, scale_ref, shift_ref, y_ref):
    x = x_ref[...].astype(jnp.float32)
    y_ref[...] = (x * scale_ref[...] + shift_ref[...]).astype(y_ref.dtype)


def _bn_sums_rows(x2d, *, block_cap=None):
    M, Ceff = x2d.shape
    default_cap, vmem_limit = _budget()
    block_cap = default_cap if block_cap is None else block_cap
    itemsize = jnp.dtype(x2d.dtype).itemsize
    tm = _pick_row_tile(M, Ceff * itemsize, block_cap)
    n_m = pl.cdiv(M, tm)
    needs_mask = (M % tm) != 0
    kernel = functools.partial(_bn_sums_rows_kernel, m_total=M,
                               needs_mask=needs_mask)
    acc_spec = pl.BlockSpec((1, Ceff), lambda i: (0, 0))
    acc_shape = jax.ShapeDtypeStruct((1, Ceff), jnp.float32)
    return pl.pallas_call(
        kernel,
        grid=(n_m,),
        in_specs=[pl.BlockSpec((tm, Ceff), lambda i: (i, 0))],
        out_specs=(acc_spec, acc_spec),
        out_shape=(acc_shape, acc_shape),
        compiler_params=pltpu.CompilerParams(
            dimension_semantics=("arbitrary",),
            vmem_limit_bytes=vmem_limit),
    )(x2d)


def _bn_norm_rows(x2d, scale_1c, shift_1c, out_dtype, *, block_cap=None):
    M, Ceff = x2d.shape
    default_cap, vmem_limit = _budget()
    block_cap = default_cap if block_cap is None else block_cap
    itemsize = max(jnp.dtype(x2d.dtype).itemsize, jnp.dtype(out_dtype).itemsize)
    tm = _pick_row_tile(M, Ceff * itemsize, block_cap)
    n_m = pl.cdiv(M, tm)
    stat_spec = pl.BlockSpec((1, Ceff), lambda i: (0, 0))
    return pl.pallas_call(
        _bn_norm_rows_kernel,
        grid=(n_m,),
        in_specs=[pl.BlockSpec((tm, Ceff), lambda i: (i, 0)),
                  stat_spec, stat_spec],
        out_specs=pl.BlockSpec((tm, Ceff), lambda i: (i, 0)),
        out_shape=jax.ShapeDtypeStruct((M, Ceff), out_dtype),
        compiler_params=pltpu.CompilerParams(
            dimension_semantics=("parallel",),
            vmem_limit_bytes=vmem_limit),
    )(x2d, scale_1c, shift_1c)


# ------------------------------ glue helpers ---------------------------------


def _finalize_stats(sum_c, sumsq_c, count, gamma, beta, eps):
    """Tiny per-channel glue: biased mean/var + folded scale/shift."""
    inv = jnp.float32(1.0 / count)
    mean = sum_c * inv
    # E[x^2] - E[x]^2 in f32; clamp the tiny negative residue.
    # TODO(synk): use a shifted sum-of-squares if activations are far from 0.
    var = jnp.maximum(sumsq_c * inv - mean * mean, 0.0)
    scale = gamma * jax.lax.rsqrt(var + jnp.float32(eps))
    shift = beta - mean * scale
    return mean, var, scale, shift


def _fold_factor(M, C):
    """# of rows folded into lanes so the 2-D lane dim is a dense 128-multiple."""
    if 0 < C < 128 and 128 % C == 0:
        k = 128 // C
        if M % k == 0:
            return k
    return 1


# ------------------------------- module port ---------------------------------


class BatchNorm:
    """JAX/Pallas port of the reference BatchNorm module (forward only).

    Conventions match the d2l-style reference, NOT torch.nn.BatchNorm2d:
      * variance is biased (divide by M) and that value also feeds moving_var,
      * moving stats: new = momentum * old + (1 - momentum) * batch_stat with
        momentum = 0.9, and moving_var starts at zeros (as in the reference).
    """

    def __init__(self, num_features, num_dims):
        assert num_dims in (2, 4)
        self.num_dims = num_dims
        self.num_features = num_features
        shape = (1, num_features) if num_dims == 2 else (1, num_features, 1, 1)
        self.param_shape = shape
        self.gamma = jnp.ones(shape, dtype=jnp.float32)
        self.beta = jnp.zeros(shape, dtype=jnp.float32)
        self.moving_mean = jnp.zeros(shape, dtype=jnp.float32)
        self.moving_var = jnp.zeros(shape, dtype=jnp.float32)
        self.training = True
        self.eps = 1e-5
        self.momentum = 0.9

    def _update_moving(self, mean, var):
        m = self.momentum
        mean = mean.reshape(self.param_shape)
        var = var.reshape(self.param_shape)
        self.moving_mean = m * self.moving_mean + (1.0 - m) * mean
        self.moving_var = m * self.moving_var + (1.0 - m) * var

    def __call__(self, x):
        C, eps = self.num_features, self.eps
        if self.num_dims == 4:
            N, xc, H, W = x.shape
            assert xc == C
            x3d = x.reshape(N, C, H * W)       # contiguous view, no transpose
            gamma = self.gamma.reshape(C, 1)
            beta = self.beta.reshape(C, 1)
            if self.training:
                s, ss = _bn_sums_nchw(x3d)
                mean, var, scale, shift = _finalize_stats(
                    s, ss, N * H * W, gamma, beta, eps)
                self._update_moving(mean, var)
            else:
                mv = self.moving_var.reshape(C, 1)
                mm = self.moving_mean.reshape(C, 1)
                scale = gamma * jax.lax.rsqrt(mv + eps)
                shift = beta - mm * scale
            y3d = _bn_norm_nchw(x3d, scale, shift, x.dtype)
            return y3d.reshape(N, C, H, W)

        M, xc = x.shape
        assert xc == C
        k = _fold_factor(M, C)                 # lane-dense fold for small C
        x_eff = x.reshape(M // k, k * C) if k > 1 else x
        gamma = self.gamma.reshape(1, C)
        beta = self.beta.reshape(1, C)
        if self.training:
            s_eff, ss_eff = _bn_sums_rows(x_eff)
            if k > 1:
                s = jnp.sum(s_eff.reshape(k, C), axis=0, keepdims=True)
                ss = jnp.sum(ss_eff.reshape(k, C), axis=0, keepdims=True)
            else:
                s, ss = s_eff, ss_eff
            mean, var, scale, shift = _finalize_stats(s, ss, M, gamma, beta, eps)
            self._update_moving(mean, var)
        else:
            mv = self.moving_var.reshape(1, C)
            mm = self.moving_mean.reshape(1, C)
            scale = gamma * jax.lax.rsqrt(mv + eps)
            shift = beta - mm * scale
        scale_eff = jnp.tile(scale, (1, k)) if k > 1 else scale
        shift_eff = jnp.tile(shift, (1, k)) if k > 1 else shift
        y_eff = _bn_norm_rows(x_eff, scale_eff, shift_eff, x.dtype)
        return y_eff.reshape(M, C) if k > 1 else y_eff


# -------------------------------- references ---------------------------------


def _ref_bn_train_4d(x, gamma, beta, eps):
    mean = x.mean(axis=(0, 2, 3), keepdims=True)
    var = ((x - mean) ** 2).mean(axis=(0, 2, 3), keepdims=True)
    return gamma * (x - mean) / jnp.sqrt(var + eps) + beta, mean, var


def _ref_bn_train_2d(x, gamma, beta, eps):
    mean = x.mean(axis=0, keepdims=True)
    var = ((x - mean) ** 2).mean(axis=0, keepdims=True)
    return gamma * (x - mean) / jnp.sqrt(var + eps) + beta, mean, var


# ----------------------------------- main -------------------------------------


if __name__ == "__main__":
    key = jax.random.PRNGKey(0)
    k1, k2, k3, k4 = jax.random.split(key, 4)

    # ---- 4-D conv-style input (NCHW), training mode -------------------------
    N, C, H, W = 2, 4, 16, 16
    x = jax.random.normal(k1, (N, C, H, W), dtype=jnp.float32)
    bn = BatchNorm(num_features=C, num_dims=4)
    y = jax.block_until_ready(bn(x))
    y_ref, mean_ref, var_ref = _ref_bn_train_4d(
        x, jnp.ones((1, C, 1, 1)), jnp.zeros((1, C, 1, 1)), 1e-5)
    assert y.shape == (N, C, H, W)
    assert jnp.allclose(y, y_ref, atol=1e-4, rtol=1e-4)
    assert jnp.allclose(bn.moving_mean, 0.1 * mean_ref, atol=1e-5)
    assert jnp.allclose(bn.moving_var, 0.1 * var_ref, atol=1e-5)

    # eval mode: same normalize kernel driven by the moving statistics
    bn.training = False
    y_eval = jax.block_until_ready(bn(x))
    y_eval_ref = (x - bn.moving_mean) / jnp.sqrt(bn.moving_var + 1e-5)
    assert jnp.allclose(y_eval, y_eval_ref, atol=1e-4, rtol=1e-4)

    # ---- 4-D with a non-128-multiple spatial plane (H*W = 49) ---------------
    N3, C3 = 2, 8
    x3 = jax.random.normal(k3, (N3, C3, 7, 7), dtype=jnp.float32)
    bn3 = BatchNorm(num_features=C3, num_dims=4)
    y3 = jax.block_until_ready(bn3(x3))
    y3_ref, _, _ = _ref_bn_train_4d(
        x3, jnp.ones((1, C3, 1, 1)), jnp.zeros((1, C3, 1, 1)), 1e-5)
    assert jnp.allclose(y3, y3_ref, atol=1e-4, rtol=1e-4)

    # ---- forced tiny block cap: exercises cdiv grid + masked edge tiles -----
    Ne, Ce, HWe = 2, 8, 200                   # 200 = 128 + 72 -> partial block
    xe = jax.random.normal(k4, (Ne, Ce, HWe), dtype=jnp.float32)
    tiny_cap = 8 * 128 * 4                    # forces tw = 128
    se, sse = _bn_sums_nchw(xe, block_cap=tiny_cap)
    _, _, scale_e, shift_e = _finalize_stats(
        se, sse, Ne * HWe, jnp.ones((Ce, 1), jnp.float32),
        jnp.zeros((Ce, 1), jnp.float32), 1e-5)
    ye = jax.block_until_ready(
        _bn_norm_nchw(xe, scale_e, shift_e, xe.dtype, block_cap=tiny_cap))
    me_ref = xe.mean(axis=(0, 2))[None, :, None]
    ve_ref = ((xe - me_ref) ** 2).mean(axis=(0, 2))[None, :, None]
    ye_ref = (xe - me_ref) / jnp.sqrt(ve_ref + 1e-5)
    assert jnp.allclose(ye, ye_ref, atol=1e-4, rtol=1e-4)

    # ---- 2-D fully-connected input (C = 32 exercises the lane-fold path) ----
    M, F = 8, 32
    x2 = jax.random.normal(k2, (M, F), dtype=jnp.float32)
    bn2 = BatchNorm(num_features=F, num_dims=2)
    y2 = jax.block_until_ready(bn2(x2))
    y2_ref, m2_ref, v2_ref = _ref_bn_train_2d(
        x2, jnp.ones((1, F)), jnp.zeros((1, F)), 1e-5)
    assert jnp.allclose(y2, y2_ref, atol=1e-4, rtol=1e-4)
    assert jnp.allclose(bn2.moving_mean, 0.1 * m2_ref, atol=1e-5)
    assert jnp.allclose(bn2.moving_var, 0.1 * v2_ref, atol=1e-5)

    print("KERNEL_OK")
</pallas_src>

<mosaic_0001>
module attributes {stable_mosaic.version = 11 : i64} {
  func.func @_bn_sums_nchw_kernel(%arg0: i32, %arg1: i32, %arg2: i32, %arg3: i32, %arg4: memref<1x4x256xf32, #tpu.memory_space<vmem>>, %arg5: memref<1x4x1xf32, #tpu.memory_space<vmem>>, %arg6: memref<1x4x1xf32, #tpu.memory_space<vmem>>) attributes {dimension_semantics = [#tpu.dimension_semantics<parallel>, #tpu.dimension_semantics<parallel>, #tpu.dimension_semantics<arbitrary>, #tpu.dimension_semantics<arbitrary>], iteration_bounds = array<i64: 2, 1, 1, 1>, scalar_prefetch = 0 : i64, scratch_operands = 0 : i64, tpu.core_type = #tpu.core_type<tc>, window_params = [{transform_indices = @transform_0, window_bounds = array<i64: 1, 4, 256>}, {transform_indices = @transform_1, window_bounds = array<i64: 1, 4, 1>}, {transform_indices = @transform_2, window_bounds = array<i64: 1, 4, 1>}]} {
    %c0_i32 = arith.constant 0 : i32
    %0 = arith.cmpi eq, %arg2, %c0_i32 : i32
    %c0_i32_0 = arith.constant 0 : i32
    %1 = arith.cmpi eq, %arg3, %c0_i32_0 : i32
    %2 = arith.andi %0, %1 : i1
    %3 = arith.extui %2 : i1 to i32
    %c0_i32_1 = arith.constant 0 : i32
    %4 = arith.cmpi ne, %3, %c0_i32_1 : i32
    scf.if %4 {
      %cst_17 = arith.constant 0.000000e+00 : f32
      %24 = vector.broadcast %cst_17 : f32 to vector<1x4x1xf32>
      %c0_18 = arith.constant 0 : index
      %c0_19 = arith.constant 0 : index
      %c0_20 = arith.constant 0 : index
      %25 = vector.load %arg5[%c0_18, %c0_19, %c0_20] : memref<1x4x1xf32, #tpu.memory_space<vmem>>, vector<1x4x1xf32>
      tpu.vector_store %arg5[%c0_18, %c0_19, %c0_20], %24 {strides = array<i32>} : memref<1x4x1xf32, #tpu.memory_space<vmem>>, vector<1x4x1xf32>,
      %cst_21 = arith.constant 0.000000e+00 : f32
      %26 = vector.broadcast %cst_21 : f32 to vector<1x4x1xf32>
      %c0_22 = arith.constant 0 : index
      %c0_23 = arith.constant 0 : index
      %c0_24 = arith.constant 0 : index
      %27 = vector.load %arg6[%c0_22, %c0_23, %c0_24] : memref<1x4x1xf32, #tpu.memory_space<vmem>>, vector<1x4x1xf32>
      tpu.vector_store %arg6[%c0_22, %c0_23, %c0_24], %26 {strides = array<i32>} : memref<1x4x1xf32, #tpu.memory_space<vmem>>, vector<1x4x1xf32>,
    } else {
    }
    %c0 = arith.constant 0 : index
    %c0_2 = arith.constant 0 : index
    %c0_3 = arith.constant 0 : index
    %5 = vector.load %arg4[%c0, %c0_2, %c0_3] : memref<1x4x256xf32, #tpu.memory_space<vmem>>, vector<1x4x256xf32>
    %6 = vector.shape_cast %5 : vector<1x4x256xf32> to vector<4x256xf32>
    %c0_4 = arith.constant 0 : index
    %c0_5 = arith.constant 0 : index
    %c0_6 = arith.constant 0 : index
    %7 = vector.load %arg5[%c0_4, %c0_5, %c0_6] : memref<1x4x1xf32, #tpu.memory_space<vmem>>, vector<1x4x1xf32>
    %8 = vector.shape_cast %7 : vector<1x4x1xf32> to vector<4x1xf32>
    %cst = arith.constant dense<0.000000e+00> : vector<4xf32>
    %9 = vector.multi_reduction <add>, %6, %cst [1] : vector<4x256xf32> to vector<4xf32>
    %10 = vector.shape_cast %9 : vector<4xf32> to vector<4x1xf32>
    %11 = arith.addf %8, %10 : vector<4x1xf32>
    %c0_7 = arith.constant 0 : index
    %c0_8 = arith.constant 0 : index
    %c0_9 = arith.constant 0 : index
    %12 = vector.load %arg5[%c0_7, %c0_8, %c0_9] : memref<1x4x1xf32, #tpu.memory_space<vmem>>, vector<1x4x1xf32>
    %13 = vector.shape_cast %12 : vector<1x4x1xf32> to vector<4x1xf32>
    %14 = vector.shape_cast %11 : vector<4x1xf32> to vector<1x4x1xf32>
    tpu.vector_store %arg5[%c0_7, %c0_8, %c0_9], %14 {strides = array<i32>} : memref<1x4x1xf32, #tpu.memory_space<vmem>>, vector<1x4x1xf32>,
    %c0_10 = arith.constant 0 : index
    %c0_11 = arith.constant 0 : index
    %c0_12 = arith.constant 0 : index
    %15 = vector.load %arg6[%c0_10, %c0_11, %c0_12] : memref<1x4x1xf32, #tpu.memory_space<vmem>>, vector<1x4x1xf32>
    %16 = vector.shape_cast %15 : vector<1x4x1xf32> to vector<4x1xf32>
    %17 = arith.mulf %6, %6 : vector<4x256xf32>
    %cst_13 = arith.constant dense<0.000000e+00> : vector<4xf32>
    %18 = vector.multi_reduction <add>, %17, %cst_13 [1] : vector<4x256xf32> to vector<4xf32>
    %19 = vector.shape_cast %18 : vector<4xf32> to vector<4x1xf32>
    %20 = arith.addf %16, %19 : vector<4x1xf32>
    %c0_14 = arith.constant 0 : index
    %c0_15 = arith.constant 0 : index
    %c0_16 = arith.constant 0 : index
    %21 = vector.load %arg6[%c0_14, %c0_15, %c0_16] : memref<1x4x1xf32, #tpu.memory_space<vmem>>, vector<1x4x1xf32>
    %22 = vector.shape_cast %21 : vector<1x4x1xf32> to vector<4x1xf32>
    %23 = vector.shape_cast %20 : vector<4x1xf32> to vector<1x4x1xf32>
    tpu.vector_store %arg6[%c0_14, %c0_15, %c0_16], %23 {strides = array<i32>} : memref<1x4x1xf32, #tpu.memory_space<vmem>>, vector<1x4x1xf32>,
    return
  }
  func.func @transform_0(%arg0: i32, %arg1: i32, %arg2: i32, %arg3: i32) -> (i32, i32, i32) {
    %c1_i32 = arith.constant 1 : i32
    %0 = arith.muli %arg0, %c1_i32 : i32
    %1 = arith.addi %0, %arg2 : i32
    %c0_i32 = arith.constant 0 : i32
    return %1, %arg1, %arg3 : i32, i32, i32
  }
  func.func @transform_1(%arg0: i32, %arg1: i32, %arg2: i32, %arg3: i32) -> (i32, i32, i32) {
    %c0_i32 = arith.constant 0 : i32
    %c0_i32_0 = arith.constant 0 : i32
    return %arg0, %arg1, %c0_i32 : i32, i32, i32
  }
  func.func @transform_2(%arg0: i32, %arg1: i32, %arg2: i32, %arg3: i32) -> (i32, i32, i32) {
    %c0_i32 = arith.constant 0 : i32
    %c0_i32_0 = arith.constant 0 : i32
    return %arg0, %arg1, %c0_i32 : i32, i32, i32
  }
}

</mosaic_0001>

<llo_original>
// kernel: tpu_custom_call.1
$region0: #{tpu_custom_call.1}
  #allocation0 [shape = 'u32[]', space=smem, size = 0x4, offset = 0x4, fixed_abs, tag = 'smem constant byte address 0x4 - core index']
  #allocation1 [shape = 'u32[144,128]{1,0:T(1,128)}', space=vmem, size = 0x12000, scoped, tag = 'internal scratch']
  %s0 = inlined_call_operand.hbm [shape: f32[2,4,256], index: 0, kind: input, shape index: {}]
  %s1 = inlined_call_operand.vmem [shape: f32[2,4,1], index: 1, kind: output, shape index: {0}]
  %s2 = inlined_call_operand.vmem [shape: f32[2,4,1], index: 2, kind: output, shape index: {1}]
  %3 = xla_tuple %s1, %s2
  %s4 = sld [smem:[#allocation0]]
  $region53: #{tpu_custom_call.1} parent=0
    _
  %s6 = ssub.s32 1, %s4
  %s7 = scalar_select 0, %s6, %s4
  $region1: #{tpu_custom_call.1} parent=0
    #allocation2 [shape = 'u8[8192]{0}', space=vmem, size = 0x2000, scoped, tag = 'input window, operand 0']
    #allocation3 [shape = 's32[2]{0}', space=sflag, size = 0x8, scoped, tag = 'scoped memory for tpu_custom_call.1']
    %8 = vsyncpa [#allocation3], 0
    %s9 = scalar_lea.sflag [#allocation3], 1
    %10 = vsyncpa %s9, 0
    loop: start=0, step=1, limit=4
    $region2: #{tpu_custom_call.1} parent=1 // loop_pre_header
      _
    $region3: #{tpu_custom_call.1} parent=1 // loop_header
      %s12 = sphi 0, %s16
      %p13 = scmp.ge.s32.totalorder %s12, 4
      %s19 = sphi 0, %s45
      %s20 = sphi 0, %s41
      %s21 = sphi 0, %s37
      %s22 = sphi 0, %s33
      %s23 = sphi 0, %s19
      %s24 = sphi 0, %s20
      %s25 = sphi 0, %s21
      %s26 = sphi 0, %s22
      %s27 = sphi 0, %s23
      %s28 = sphi 0, %s24
      %s29 = sphi 0, %s25
      %s30 = sphi 0, %s26
      %s54 = sphi 0, %s56
      %s57 = sphi 0, %s54
      %s58 = sphi 0, %s57
      %s74 = sphi 0, %s58
      %s82 = sphi 0, %s84
      %s85 = sphi 0, %s82
      %s86 = sphi 0, %s85
      %s102 = sphi 0, %s86
      %s110 = sphi 0, %s112
      %s113 = sphi 0, %s110
      %s114 = sphi 0, %s113
      %s130 = sphi 0, %s114
    $region4: #{tpu_custom_call.1} parent=1 // loop_header_branch
      %15 = sbr.rel (%p13) target = $region8
    $region5: #{tpu_custom_call.1} parent=1 // loop_body
      %s17 = ssub.s32 %s12, 1
      %s18 = ssub.s32 %s12, 2
      %s31 = sadd.s32 1, %s22
      %p32 = scmp.ge.s32.totalorder %s31, 1
      %s33 = scalar_select %p32, 0, %s31
      %s34 = sadd.s32 1, %s21
      %s35 = scalar_select %p32, %s34, %s21
      %p36 = scmp.ge.s32.totalorder %s35, 1
      %s37 = scalar_select %p36, 0, %s35
      %s38 = sadd.s32 1, %s20
      %s39 = scalar_select %p36, %s38, %s20
      %p40 = scmp.ge.s32.totalorder %s39, 1
      %s41 = scalar_select %p40, 0, %s39
      %s42 = sadd.s32 1, %s19
      %s43 = scalar_select %p40, %s42, %s19
      %p44 = scmp.ge.s32.totalorder %s43, 2
      %s45 = scalar_select %p44, 0, %s43
      %s46 = sadd.s32 %s19, %s21
      %s47 = sadd.s32 %s45, %s37
      %s48 = ssub.s32 %s46, %s47
      %s49 = ssub.s32 %s20, %s41
      %s50 = sor.u32 %s48, %s49
      %s51 = ssub.s32 %s22, %s33
      %s52 = sor.u32 %s50, %s51
      %p53 = scmp.eq.s32.totalorder %s52, 0
      %s55 = sadd.s32 %s54, 1
      %s56 = scalar_select %p53, %s54, %s55
      %p59 = pneg %p53
      %p60 = scmp.eq.s32.totalorder %s12, 1
      %p61 = por %p59, %p60
      %p62 = scmp.ne.s32.totalorder %s54, %s57
      %p63 = scmp.eq.s32.totalorder %s12, 0
      %p64 = por %p62, %p63
      %p65 = scmp.ne.s32.totalorder %s54, %s57
      %p66 = scmp.eq.s32.totalorder %s17, 1
      %p67 = por %p65, %p66
      %p68 = scmp.ne.s32.totalorder %s57, %s58
      %p69 = scmp.eq.s32.totalorder %s17, 0
      %p70 = por %p68, %p69
      %p71 = scmp.ne.s32.totalorder %s57, %s58
      %p72 = scmp.eq.s32.totalorder %s18, 1
      %p73 = por %p71, %p72
      %p75 = scmp.ne.s32.totalorder %s58, %s74
      %p76 = scmp.eq.s32.totalorder %s18, 0
      %p77 = por %p75, %p76
      %s78 = ssub.s32 %s19, %s45
      %s79 = ssub.s32 %s20, %s41
      %s80 = sor.u32 %s78, %s79
      %p81 = scmp.eq.s32.totalorder %s80, 0
      %s83 = sadd.s32 %s82, 1
      %s84 = scalar_select %p81, %s82, %s83
      %p87 = pneg %p81
      %p88 = scmp.eq.s32.totalorder %s12, 1
      %p89 = por %p87, %p88
      %p90 = scmp.ne.s32.totalorder %s82, %s85
      %p91 = scmp.eq.s32.totalorder %s12, 0
      %p92 = por %p90, %p91
      %p93 = scmp.ne.s32.totalorder %s82, %s85
      %p94 = scmp.eq.s32.totalorder %s17, 1
      %p95 = por %p93, %p94
      %p96 = scmp.ne.s32.totalorder %s85, %s86
      %p97 = scmp.eq.s32.totalorder %s17, 0
      %p98 = por %p96, %p97
      %p99 = scmp.ne.s32.totalorder %s85, %s86
      %p100 = scmp.eq.s32.totalorder %s18, 1
      %p101 = por %p99, %p100
      %p103 = scmp.ne.s32.totalorder %s86, %s102
      %p104 = scmp.eq.s32.totalorder %s18, 0
      %p105 = por %p103, %p104
      %s106 = ssub.s32 %s19, %s45
      %s107 = ssub.s32 %s20, %s41
      %s108 = sor.u32 %s106, %s107
      %p109 = scmp.eq.s32.totalorder %s108, 0
      %s111 = sadd.s32 %s110, 1
      %s112 = scalar_select %p109, %s110, %s111
      %p115 = pneg %p109
      %p116 = scmp.eq.s32.totalorder %s12, 1
      %p117 = por %p115, %p116
      %p118 = scmp.ne.s32.totalorder %s110, %s113
      %p119 = scmp.eq.s32.totalorder %s12, 0
      %p120 = por %p118, %p119
      %p121 = scmp.ne.s32.totalorder %s110, %s113
      %p122 = scmp.eq.s32.totalorder %s17, 1
      %p123 = por %p121, %p122
      %p124 = scmp.ne.s32.totalorder %s113, %s114
      %p125 = scmp.eq.s32.totalorder %s17, 0
      %p126 = por %p124, %p125
      %p127 = scmp.ne.s32.totalorder %s113, %s114
      %p128 = scmp.eq.s32.totalorder %s18, 1
      %p129 = por %p127, %p128
      %p131 = scmp.ne.s32.totalorder %s114, %s130
      %p132 = scmp.eq.s32.totalorder %s18, 0
      %p133 = por %p131, %p132
      %p134 = scmp.le.s32.totalorder 1, %s12
      %p135 = scmp.lt.s32.totalorder %s12, 3
      %p136 = pnand %p134, %p135
      %p137 = pneg %p136
      // Predicated region
      $region9: #{tpu_custom_call.1} parent=5 // pred_check
        _
      $region10: #{tpu_custom_call.1} parent=5 // pred_check_branch
        %139 = sbr.rel (%p136) target = $region12
      $region11: #{tpu_custom_call.1} parent=5 // pred_region
        %s140 = ssub.s32 %s12, 1
      $region12: #{tpu_custom_call.1} parent=5 // pred_fallthru
        _
      %p141 = scmp.lt.s32.totalorder %s12, 2
      // Predicated region
      $region13: #{tpu_custom_call.1} parent=5 // pred_check
        %p142 = pneg %p141
      $region14: #{tpu_custom_call.1} parent=5 // pred_check_branch
        %144 = sbr.rel (%p142) target = $region16
      $region15: #{tpu_custom_call.1} parent=5 // pred_region
        // Predicated region
        $region17: #{tpu_custom_call.1} parent=15 // pred_check
          %p145 = pneg %p64
        $region18: #{tpu_custom_call.1} parent=15 // pred_check_branch
          %147 = sbr.rel (%p145) target = $region20
        $region19: #{tpu_custom_call.1} parent=15 // pred_region
          %s148 = sand.u32 %s54, 1
          %s149 = scalar_lea.sflag [#allocation3], %s148
          %s150 = sand.u32 %s54, 1
          %s151 = smul.addr %s150, 8
          %s152 = scalar_lea.vmem [#allocation2], %s151
          %s153 = sadd.s32 %s19, %s21
          %s154 = smul.u32 2, %s22
          %s156 = ssub.s32 128, 128
          %157 = vsyncadd %s149, %s156
          %s158 = smul.addr %s20, 2
          %s159 = sadd.s32 %s154, %s158
          %s160 = smul.addr %s153, 2
          %s161 = sadd.s32 %s159, %s160
          %s162 = smul.addr %s161, 64
          %s163 = scalar_lea.hbm %s0, %s162
          %s165 = sshll.u32 %s152, 4
          %s166 = int_to_ptr.vmem [resolvable:$true] %s165
          %168 = dma.hbm_to_vmem [thread:$0]  %s163, 128, %s166, %s149
        $region20: #{tpu_custom_call.1} parent=15 // pred_fallthru
          _
      $region16: #{tpu_custom_call.1} parent=5 // pred_fallthru
        _
      %p169 = scmp.le.s32.totalorder 1, %s12
      %p170 = scmp.lt.s32.totalorder %s12, 3
      %p171 = pnand %p169, %p170
      %p172 = pneg %p171
      // Predicated region
      $region21: #{tpu_custom_call.1} parent=5 // pred_check
        _
      $region22: #{tpu_custom_call.1} parent=5 // pred_check_branch
        %174 = sbr.rel (%p171) target = $region24
      $region23: #{tpu_custom_call.1} parent=5 // pred_region
        %s175 = ssub.s32 %s12, 1
        %s176 = sand.u32 %s57, 1
        %s177 = scalar_lea.sflag [#allocation3], %s176
        %s178 = sand.u32 %s57, 1
        %s179 = smul.addr %s178, 8
        %s180 = scalar_lea.vmem [#allocation2], %s179
        // Predicated region
        $region25: #{tpu_custom_call.1} parent=23 // pred_check
          %p181 = pneg %p70
        $region26: #{tpu_custom_call.1} parent=23 // pred_check_branch
          %183 = sbr.rel (%p181) target = $region28
        $region27: #{tpu_custom_call.1} parent=23 // pred_region
          %184 = dma.done %s177, 128
        $region28: #{tpu_custom_call.1} parent=23 // pred_fallthru
          _
        %s185 = sand.u32 %s57, 1
        %s186 = scalar_lea.sflag [#allocation3], %s185
        %s187 = sand.u32 %s57, 1
        %s188 = smul.addr %s187, 8
        %s189 = scalar_lea.vmem [#allocation2], %s188
        %p190 = pneg %p70
        %p191 = pneg %p67
        %p192 = pneg %p98
        %p193 = pneg %p95
        %p194 = scmp.lt.s32.totalorder %s23, 1
        %s195 = scalar_select %p194, %s23, 1
        %p196 = scmp.lt.s32.totalorder %s24, 0
        %s197 = scalar_select %p196, %s24, 0
        %s198 = sadd.s32 %s197, %s195
        %s199 = smul.addr %s198, 4
        %s200 = scalar_lea.vmem %s1, %s199
        %p201 = pneg %p126
        %p202 = pneg %p123
        %p203 = scmp.lt.s32.totalorder %s23, 1
        %s204 = scalar_select %p203, %s23, 1
        %p205 = scmp.lt.s32.totalorder %s24, 0
        %s206 = scalar_select %p205, %s24, 0
        %s207 = sadd.s32 %s206, %s204
        %s208 = smul.addr %s207, 4
        %s209 = scalar_lea.vmem %s2, %s208
        %s210 = sadd.s32 %s23, %s25
        %s211 = smul.u32 2, %s26
        %p212 = scmp.lt.s32.totalorder %s23, 1
        %s213 = scalar_select %p212, %s23, 1
        %p214 = scmp.lt.s32.totalorder %s24, 0
        %s215 = scalar_select %p214, %s24, 0
        %s216 = sadd.s32 %s215, %s213
        %s217 = smul.addr %s216, 4
        %s218 = scalar_lea.vmem %s1, %s217
        %p219 = scmp.lt.s32.totalorder %s23, 1
        %s220 = scalar_select %p219, %s23, 1
        %p221 = scmp.lt.s32.totalorder %s24, 0
        %s222 = scalar_select %p221, %s24, 0
        %s223 = sadd.s32 %s222, %s220
        %s224 = smul.addr %s223, 4
        %s225 = scalar_lea.vmem %s2, %s224
        %p226 = scmp.eq.s32.totalorder %s25, 0
        %p227 = scmp.eq.s32.totalorder %s26, 0
        %p228 = pnand %p226, %p227
        %p229 = pneg %p228
        // Predicated region
        $region29: #{tpu_custom_call.1} parent=23 // pred_check
          _
        $region30: #{tpu_custom_call.1} parent=23 // pred_check_branch
          %231 = sbr.rel (%p228) target = $region32
        $region31: #{tpu_custom_call.1} parent=23 // pred_region
          %vm232 = vcmask 3072
          %233 = vst.msk [vmem:[%s218] sm:$0xf] %vm232, 0.0
          %234 = vst.msk [vmem:[%s225] sm:$0xf] %vm232, 0.0
        $region32: #{tpu_custom_call.1} parent=23 // pred_fallthru
          _
        %v235 = vld [vmem:[%s180] sm:$0xff]
        %v236 = vld [vmem:[%s218] sm:$0xf]
        %v238 = vcombine.high %v235, %v235
        %vm240 = vcmask 1043456
        %v241 = vsel %vm240, %v235, 0.0
        %v242 = vsel %vm240, %v238, 0.0
        %v243 = vadd.f32 %v241, %v242
        %244 = vadd.xlane.f32.xlu0 %v243
        %v245 = vpop.xlane.xlu0 %244
        %v246 = vadd.f32 %v236, %v245
        %vm247 = vcmask 3072
        %248 = vst.msk [vmem:[%s218] sm:$0xf] %vm247, %v246
        %v249 = vld [vmem:[%s225] sm:$0xf]
        %v250 = vmul.f32 %v235, %v235
        %v252 = vcombine.high %v250, %v250
        %v254 = vsel %vm240, %v250, 0.0
        %v255 = vsel %vm240, %v252, 0.0
        %v256 = vadd.f32 %v254, %v255
        %257 = vadd.xlane.f32.xlu0 %v256
        %v258 = vpop.xlane.xlu0 %257
        %v259 = vadd.f32 %v249, %v258
        %260 = vst.msk [vmem:[%s225] sm:$0xf] %vm247, %v259
        %p261 = scmp.lt.s32.totalorder %s23, 1
        %s262 = scalar_select %p261, %s23, 1
        %p263 = scmp.lt.s32.totalorder %s24, 0
        %s264 = scalar_select %p263, %s24, 0
        %s265 = sadd.s32 %s264, %s262
        %s266 = smul.addr %s265, 4
        %s267 = scalar_lea.vmem %s1, %s266
        %p268 = scmp.lt.s32.totalorder %s23, 1
        %s269 = scalar_select %p268, %s23, 1
        %p270 = scmp.lt.s32.totalorder %s24, 0
        %s271 = scalar_select %p270, %s24, 0
        %s272 = sadd.s32 %s271, %s269
        %s273 = smul.addr %s272, 4
        %s274 = scalar_lea.vmem %s2, %s273
        // Predicated region
        $region33: #{tpu_custom_call.1} parent=23 // pred_check
          %p275 = pneg %p95
        $region34: #{tpu_custom_call.1} parent=23 // pred_check_branch
          %277 = sbr.rel (%p275) target = $region36
        $region35: #{tpu_custom_call.1} parent=23 // pred_region
          _
        $region36: #{tpu_custom_call.1} parent=23 // pred_fallthru
          _
        // Predicated region
        $region37: #{tpu_custom_call.1} parent=23 // pred_check
          %p278 = pneg %p123
        $region38: #{tpu_custom_call.1} parent=23 // pred_check_branch
          %280 = sbr.rel (%p278) target = $region40
        $region39: #{tpu_custom_call.1} parent=23 // pred_region
          _
        $region40: #{tpu_custom_call.1} parent=23 // pred_fallthru
          _
      $region24: #{tpu_custom_call.1} parent=5 // pred_fallthru
        _
      %p281 = scmp.le.s32.totalorder 2, %s12
      // Predicated region
      $region41: #{tpu_custom_call.1} parent=5 // pred_check
        %p282 = pneg %p281
      $region42: #{tpu_custom_call.1} parent=5 // pred_check_branch
        %284 = sbr.rel (%p282) target = $region44
      $region43: #{tpu_custom_call.1} parent=5 // pred_region
        %s285 = ssub.s32 %s12, 2
        // Predicated region
        $region45: #{tpu_custom_call.1} parent=43 // pred_check
          %p286 = pneg %p101
        $region46: #{tpu_custom_call.1} parent=43 // pred_check_branch
          %288 = sbr.rel (%p286) target = $region48
        $region47: #{tpu_custom_call.1} parent=43 // pred_region
          %p289 = scmp.lt.s32.totalorder %s27, 1
          %s290 = scalar_select %p289, %s27, 1
          %p291 = scmp.lt.s32.totalorder %s28, 0
          %s292 = scalar_select %p291, %s28, 0
          %s293 = sadd.s32 %s292, %s290
          %s294 = smul.addr %s293, 4
          %s295 = scalar_lea.vmem %s1, %s294
        $region48: #{tpu_custom_call.1} parent=43 // pred_fallthru
          _
        // Predicated region
        $region49: #{tpu_custom_call.1} parent=43 // pred_check
          %p296 = pneg %p129
        $region50: #{tpu_custom_call.1} parent=43 // pred_check_branch
          %298 = sbr.rel (%p296) target = $region52
        $region51: #{tpu_custom_call.1} parent=43 // pred_region
          %p299 = scmp.lt.s32.totalorder %s27, 1
          %s300 = scalar_select %p299, %s27, 1
          %p301 = scmp.lt.s32.totalorder %s28, 0
          %s302 = scalar_select %p301, %s28, 0
          %s303 = sadd.s32 %s302, %s300
          %s304 = smul.addr %s303, 4
          %s305 = scalar_lea.vmem %s2, %s304
        $region52: #{tpu_custom_call.1} parent=43 // pred_fallthru
          _
      $region44: #{tpu_custom_call.1} parent=5 // pred_fallthru
        _
    $region6: #{tpu_custom_call.1} parent=1 // loop_footer
      %s16 = sadd.s32 1, %s12
    $region7: #{tpu_custom_call.1} parent=1 // loop_footer_branch
      %11 = sbr.rel target = $region3
    $region8: #{tpu_custom_call.1} parent=1 // loop_exit
      _
    %306 = vsyncpa [#allocation3], 1
    %s307 = scalar_lea.sflag [#allocation3], 1
    %308 = vsyncpa %s307, 1

</llo_original>
